<compile_context>
chip_gen: v7x
topology: tpu7x:2x2x1
jax: 0.10.0
libtpu: 0.0.40
codegen_flags: <defaults>
</compile_context>

<pallas_src>
import math

import jax
import jax.numpy as jnp
from jax.experimental import pallas as pl
from jax.experimental.pallas import tpu as pltpu


def conv2d_im2col_kernel(p_ref, w_ref, b_ref, o_ref):
    """One image's convolution as a single im2col matmul on the MXU.

    p_ref: (1, Ho*Wo, K)    im2col patches, K = KH*KW*Cin
    w_ref: (K, Cout)        reshaped filters
    b_ref: (1, Cout)        bias
    o_ref: (1, Ho*Wo, Cout) output tile
    """
    acc = jnp.dot(p_ref[0], w_ref[...], preferred_element_type=jnp.float32)
    o_ref[0] = (acc + b_ref[...]).astype(o_ref.dtype)


def conv2d_pallas(x_nchw, weight_oihw, bias):
    """nn.Conv2d(3, 64, kernel_size=3) forward (VALID, stride 1). NCHW in/out."""
    N, Cin, H, W = x_nchw.shape
    Cout, _, KH, KW = weight_oihw.shape
    Ho, Wo = H - KH + 1, W - KW + 1
    K = KH * KW * Cin          # 27
    M = Ho * Wo                # output pixels per image

    # ---- layout plumbing only (no arithmetic) ------------------------------
    # im2col: lane-dense patch matrix (N, Ho*Wo, 27).  Removes the Cin=3
    # lane-padding waste and the per-(kh,kw) sublane-offset slices of the
    # previous version; the kernel becomes DMA + one MXU matmul per image.
    x = jnp.transpose(x_nchw, (0, 2, 3, 1))                    # (N, H, W, Cin)
    cols = [x[:, kh:kh + Ho, kw:kw + Wo, :]                    # (N, Ho, Wo, Cin)
            for kh in range(KH) for kw in range(KW)]
    patches = jnp.concatenate(cols, axis=-1).reshape(N, M, K)  # (N, M, 27)

    # Match the (kh, kw, cin) ordering used to build `patches`.
    w2d = jnp.transpose(weight_oihw, (2, 3, 1, 0)).reshape(K, Cout)  # (27, Cout)
    b2d = bias.reshape(1, Cout)

    out = pl.pallas_call(
        conv2d_im2col_kernel,
        out_shape=jax.ShapeDtypeStruct((N, M, Cout), x_nchw.dtype),
        grid=(N,),
        in_specs=[
            pl.BlockSpec((1, M, K), lambda n: (n, 0, 0)),
            pl.BlockSpec((K, Cout), lambda n: (0, 0)),
            pl.BlockSpec((1, Cout), lambda n: (0, 0)),
        ],
        out_specs=pl.BlockSpec((1, M, Cout), lambda n: (n, 0, 0)),
        compiler_params=pltpu.CompilerParams(
            # Legal: each grid step writes a distinct output block.  Lets v7x
            # shard the batch across its 2 TensorCores; no-op on v5e / v6e.
            dimension_semantics=("parallel",)),
    )(patches, w2d, b2d)

    # Back to NCHW.
    return jnp.transpose(out.reshape(N, Ho, Wo, Cout), (0, 3, 1, 2))


if __name__ == "__main__":
    key = jax.random.PRNGKey(0)
    kx, kw, kb = jax.random.split(key, 3)

    # Small shapes consistent with the module: Conv2d(3, 64, 3) on 16x16 images.
    N, Cin, H, W = 2, 3, 16, 16
    Cout, KH, KW = 64, 3, 3

    x = jax.random.normal(kx, (N, Cin, H, W), dtype=jnp.float32)

    # Deterministic parameter init mimicking nn.Conv2d defaults
    # (uniform in [-1/sqrt(fan_in), 1/sqrt(fan_in)]).
    fan_in = Cin * KH * KW
    bound = 1.0 / math.sqrt(fan_in)
    weight = jax.random.uniform(kw, (Cout, Cin, KH, KW), jnp.float32,
                                minval=-bound, maxval=bound)
    bias = jax.random.uniform(kb, (Cout,), jnp.float32,
                              minval=-bound, maxval=bound)

    out = jax.jit(conv2d_pallas)(x, weight, bias)
    out = jax.block_until_ready(out)

    # Reference check against XLA's convolution.
    ref = jax.lax.conv_general_dilated(
        x, weight, window_strides=(1, 1), padding="VALID",
        dimension_numbers=("NCHW", "OIHW", "NCHW"))
    ref = ref + bias[None, :, None, None]

    assert out.shape == (N, Cout, H - KH + 1, W - KW + 1), out.shape
    assert out.dtype == jnp.float32
    assert jnp.allclose(out, ref, atol=1e-4, rtol=1e-4)

    print("KERNEL_OK")
</pallas_src>

<mosaic_0001>
module attributes {stable_mosaic.version = 11 : i64} {
  func.func @conv2d_im2col_kernel(%arg0: i32, %arg1: memref<1x196x27xf32, #tpu.memory_space<vmem>>, %arg2: memref<27x64xf32, #tpu.memory_space<vmem>>, %arg3: memref<1x64xf32, #tpu.memory_space<vmem>>, %arg4: memref<1x196x64xf32, #tpu.memory_space<vmem>>) attributes {dimension_semantics = [#tpu.dimension_semantics<parallel>], iteration_bounds = array<i64: 2>, scalar_prefetch = 0 : i64, scratch_operands = 0 : i64, tpu.core_type = #tpu.core_type<tc>, window_params = [{transform_indices = @transform_0, window_bounds = array<i64: 1, 196, 27>}, {pipeline_mode = #tpu.pipeline_mode<synchronous>, transform_indices = @transform_1, window_bounds = array<i64: 27, 64>}, {pipeline_mode = #tpu.pipeline_mode<synchronous>, transform_indices = @transform_2, window_bounds = array<i64: 1, 64>}, {transform_indices = @transform_3, window_bounds = array<i64: 1, 196, 64>}]} {
    %c0 = arith.constant 0 : index
    %c0_0 = arith.constant 0 : index
    %c0_1 = arith.constant 0 : index
    %0 = vector.load %arg1[%c0, %c0_0, %c0_1] : memref<1x196x27xf32, #tpu.memory_space<vmem>>, vector<1x196x27xf32>
    %1 = vector.shape_cast %0 : vector<1x196x27xf32> to vector<196x27xf32>
    %c0_2 = arith.constant 0 : index
    %c0_3 = arith.constant 0 : index
    %2 = vector.load %arg2[%c0_2, %c0_3] : memref<27x64xf32, #tpu.memory_space<vmem>>, vector<27x64xf32>
    %cst = arith.constant dense<0.000000e+00> : vector<196x64xf32>
    %3 = tpu.matmul %1, %2, %cst {dimension_numbers = #tpu.dot_dimension_numbers<[1], [0], [0], [1], [0, 0, 1, 1], [], []>} : vector<196x27xf32>, vector<27x64xf32>, vector<196x64xf32> -> vector<196x64xf32>
    %c0_4 = arith.constant 0 : index
    %c0_5 = arith.constant 0 : index
    %4 = vector.load %arg3[%c0_4, %c0_5] : memref<1x64xf32, #tpu.memory_space<vmem>>, vector<1x64xf32>
    %5 = vector.broadcast %4 : vector<1x64xf32> to vector<196x64xf32>
    %6 = arith.addf %3, %5 : vector<196x64xf32>
    %c0_6 = arith.constant 0 : index
    %c0_7 = arith.constant 0 : index
    %c0_8 = arith.constant 0 : index
    %7 = vector.load %arg4[%c0_6, %c0_7, %c0_8] : memref<1x196x64xf32, #tpu.memory_space<vmem>>, vector<1x196x64xf32>
    %8 = vector.shape_cast %7 : vector<1x196x64xf32> to vector<196x64xf32>
    %9 = vector.shape_cast %6 : vector<196x64xf32> to vector<1x196x64xf32>
    tpu.vector_store %arg4[%c0_6, %c0_7, %c0_8], %9 {strides = array<i32>} : memref<1x196x64xf32, #tpu.memory_space<vmem>>, vector<1x196x64xf32>,
    return
  }
  func.func @transform_0(%arg0: i32) -> (i32, i32, i32) {
    %c0_i32 = arith.constant 0 : i32
    %c0_i32_0 = arith.constant 0 : i32
    %c0_i32_1 = arith.constant 0 : i32
    return %arg0, %c0_i32, %c0_i32_0 : i32, i32, i32
  }
  func.func @transform_1(%arg0: i32) -> (i32, i32) {
    %c0_i32 = arith.constant 0 : i32
    %c0_i32_0 = arith.constant 0 : i32
    %c0_i32_1 = arith.constant 0 : i32
    return %c0_i32, %c0_i32_0 : i32, i32
  }
  func.func @transform_2(%arg0: i32) -> (i32, i32) {
    %c0_i32 = arith.constant 0 : i32
    %c0_i32_0 = arith.constant 0 : i32
    %c0_i32_1 = arith.constant 0 : i32
    return %c0_i32, %c0_i32_0 : i32, i32
  }
  func.func @transform_3(%arg0: i32) -> (i32, i32, i32) {
    %c0_i32 = arith.constant 0 : i32
    %c0_i32_0 = arith.constant 0 : i32
    %c0_i32_1 = arith.constant 0 : i32
    return %arg0, %c0_i32, %c0_i32_0 : i32, i32, i32
  }
}

</mosaic_0001>

<llo_original>
// kernel: conv2d_pallas.1
$region0: #{conv2d_pallas.1}
  #allocation0 [shape = 'u32[]', space=smem, size = 0x4, offset = 0x4, fixed_abs, tag = 'smem constant byte address 0x4 - core index']
  #allocation1 [shape = 'u32[144,128]{1,0:T(1,128)}', space=vmem, size = 0x12000, scoped, tag = 'internal scratch']
  %s0 = inlined_call_operand.vmem [shape: f32[2,196,27], index: 0, kind: input, shape index: {}]
  %s1 = inlined_call_operand.vmem [shape: f32[27,64], index: 1, kind: input, shape index: {}]
  %s2 = inlined_call_operand.vmem [shape: f32[1,64], index: 2, kind: input, shape index: {}]
  %s3 = inlined_call_operand.vmem [shape: f32[2,196,64], index: 3, kind: output, shape index: {}]
  %s4 = sld [smem:[#allocation0]]
  $region45: #{conv2d_pallas.1} parent=0
    _
  %s6 = ssub.s32 1, %s4
  %s7 = scalar_select 0, %s6, %s4
  loop: start=0, step=1, limit=4
  $region2: #{conv2d_pallas.1} parent=0 // loop_pre_header
    _
  $region3: #{conv2d_pallas.1} parent=0 // loop_header
    %s9 = sphi 0, %s13
    %p10 = scmp.ge.s32.totalorder %s9, 4
    %s19 = sphi 0, %s21
    %s22 = sphi 0, %s19
    %s23 = sphi 0, %s22
    %s39 = sphi 0, %s23
    %s43 = sphi 0, %s43
    %s45 = sphi 0, %s43
    %s46 = sphi 0, %s45
    %s60 = sphi 0, %s46
    %s64 = sphi 0, %s64
    %s66 = sphi 0, %s64
    %s67 = sphi 0, %s66
    %s81 = sphi 0, %s67
    %s87 = sphi 0, %s89
    %s90 = sphi 0, %s87
    %s91 = sphi 0, %s90
    %s107 = sphi 0, %s91
  $region4: #{conv2d_pallas.1} parent=0 // loop_header_branch
    %12 = sbr.rel (%p10) target = $region8
  $region5: #{conv2d_pallas.1} parent=0 // loop_body
    %s14 = ssub.s32 %s9, 1
    %s15 = ssub.s32 %s9, 2
    %s16 = sadd.s32 %s9, 1
    %s17 = ssub.s32 %s9, %s16
    %p18 = scmp.eq.s32.totalorder %s17, 0
    %s20 = sadd.s32 %s19, 1
    %s21 = scalar_select %p18, %s19, %s20
    %p24 = pneg %p18
    %p25 = scmp.eq.s32.totalorder %s9, 1
    %p26 = por %p24, %p25
    %p27 = scmp.ne.s32.totalorder %s19, %s22
    %p28 = scmp.eq.s32.totalorder %s9, 0
    %p29 = por %p27, %p28
    %p30 = scmp.ne.s32.totalorder %s19, %s22
    %p31 = scmp.eq.s32.totalorder %s14, 1
    %p32 = por %p30, %p31
    %p33 = scmp.ne.s32.totalorder %s22, %s23
    %p34 = scmp.eq.s32.totalorder %s14, 0
    %p35 = por %p33, %p34
    %p36 = scmp.ne.s32.totalorder %s22, %s23
    %p37 = scmp.eq.s32.totalorder %s15, 1
    %p38 = por %p36, %p37
    %p40 = scmp.ne.s32.totalorder %s23, %s39
    %p41 = scmp.eq.s32.totalorder %s15, 0
    %p42 = por %p40, %p41
    %s44 = sadd.s32 %s43, 1
    %p47 = scmp.eq.s32.totalorder %s9, 1
    %p48 = scmp.ne.s32.totalorder %s43, %s45
    %p49 = scmp.eq.s32.totalorder %s9, 0
    %p50 = por %p48, %p49
    %p51 = scmp.ne.s32.totalorder %s43, %s45
    %p52 = scmp.eq.s32.totalorder %s14, 1
    %p53 = por %p51, %p52
    %p54 = scmp.ne.s32.totalorder %s45, %s46
    %p55 = scmp.eq.s32.totalorder %s14, 0
    %p56 = por %p54, %p55
    %p57 = scmp.ne.s32.totalorder %s45, %s46
    %p58 = scmp.eq.s32.totalorder %s15, 1
    %p59 = por %p57, %p58
    %p61 = scmp.ne.s32.totalorder %s46, %s60
    %p62 = scmp.eq.s32.totalorder %s15, 0
    %p63 = por %p61, %p62
    %s65 = sadd.s32 %s64, 1
    %p68 = scmp.eq.s32.totalorder %s9, 1
    %p69 = scmp.ne.s32.totalorder %s64, %s66
    %p70 = scmp.eq.s32.totalorder %s9, 0
    %p71 = por %p69, %p70
    %p72 = scmp.ne.s32.totalorder %s64, %s66
    %p73 = scmp.eq.s32.totalorder %s14, 1
    %p74 = por %p72, %p73
    %p75 = scmp.ne.s32.totalorder %s66, %s67
    %p76 = scmp.eq.s32.totalorder %s14, 0
    %p77 = por %p75, %p76
    %p78 = scmp.ne.s32.totalorder %s66, %s67
    %p79 = scmp.eq.s32.totalorder %s15, 1
    %p80 = por %p78, %p79
    %p82 = scmp.ne.s32.totalorder %s67, %s81
    %p83 = scmp.eq.s32.totalorder %s15, 0
    %p84 = por %p82, %p83
    %s85 = ssub.s32 %s9, %s16
    %p86 = scmp.eq.s32.totalorder %s85, 0
    %s88 = sadd.s32 %s87, 1
    %s89 = scalar_select %p86, %s87, %s88
    %p92 = pneg %p86
    %p93 = scmp.eq.s32.totalorder %s9, 1
    %p94 = por %p92, %p93
    %p95 = scmp.ne.s32.totalorder %s87, %s90
    %p96 = scmp.eq.s32.totalorder %s9, 0
    %p97 = por %p95, %p96
    %p98 = scmp.ne.s32.totalorder %s87, %s90
    %p99 = scmp.eq.s32.totalorder %s14, 1
    %p100 = por %p98, %p99
    %p101 = scmp.ne.s32.totalorder %s90, %s91
    %p102 = scmp.eq.s32.totalorder %s14, 0
    %p103 = por %p101, %p102
    %p104 = scmp.ne.s32.totalorder %s90, %s91
    %p105 = scmp.eq.s32.totalorder %s15, 1
    %p106 = por %p104, %p105
    %p108 = scmp.ne.s32.totalorder %s91, %s107
    %p109 = scmp.eq.s32.totalorder %s15, 0
    %p110 = por %p108, %p109
    %p111 = scmp.le.s32.totalorder 1, %s9
    %p112 = scmp.lt.s32.totalorder %s9, 3
    %p113 = pnand %p111, %p112
    %p114 = pneg %p113
    // Predicated region
    $region9: #{conv2d_pallas.1} parent=5 // pred_check
      _
    $region10: #{conv2d_pallas.1} parent=5 // pred_check_branch
      %116 = sbr.rel (%p113) target = $region12
    $region11: #{conv2d_pallas.1} parent=5 // pred_region
      %s117 = ssub.s32 %s9, 1
      // Predicated region
      $region13: #{conv2d_pallas.1} parent=11 // pred_check
        %p118 = pneg %p56
      $region14: #{conv2d_pallas.1} parent=11 // pred_check_branch
        %120 = sbr.rel (%p118) target = $region16
      $region15: #{conv2d_pallas.1} parent=11 // pred_region
        _
      $region16: #{conv2d_pallas.1} parent=11 // pred_fallthru
        _
      // Predicated region
      $region17: #{conv2d_pallas.1} parent=11 // pred_check
        %p121 = pneg %p77
      $region18: #{conv2d_pallas.1} parent=11 // pred_check_branch
        %123 = sbr.rel (%p121) target = $region20
      $region19: #{conv2d_pallas.1} parent=11 // pred_region
        _
      $region20: #{conv2d_pallas.1} parent=11 // pred_fallthru
        _
    $region12: #{conv2d_pallas.1} parent=5 // pred_fallthru
      _
    %p124 = scmp.lt.s32.totalorder %s9, 2
    // Predicated region
    $region21: #{conv2d_pallas.1} parent=5 // pred_check
      %p125 = pneg %p124
    $region22: #{conv2d_pallas.1} parent=5 // pred_check_branch
      %127 = sbr.rel (%p125) target = $region24
    $region23: #{conv2d_pallas.1} parent=5 // pred_region
      // Predicated region
      $region25: #{conv2d_pallas.1} parent=23 // pred_check
        %p128 = pneg %p29
      $region26: #{conv2d_pallas.1} parent=23 // pred_check_branch
        %130 = sbr.rel (%p128) target = $region28
      $region27: #{conv2d_pallas.1} parent=23 // pred_region
        %p131 = scmp.lt.s32.totalorder %s9, 1
        %s132 = scalar_select %p131, %s9, 1
        %s133 = smul.addr %s132, 25
        %s134 = smul.addr %s133, 8
        %s135 = scalar_lea.vmem %s0, %s134
      $region28: #{conv2d_pallas.1} parent=23 // pred_fallthru
        _
    $region24: #{conv2d_pallas.1} parent=5 // pred_fallthru
      _
    %p136 = scmp.le.s32.totalorder 1, %s9
    %p137 = scmp.lt.s32.totalorder %s9, 3
    %p138 = pnand %p136, %p137
    %p139 = pneg %p138
    // Predicated region
    $region29: #{conv2d_pallas.1} parent=5 // pred_check
      _
    $region30: #{conv2d_pallas.1} parent=5 // pred_check_branch
      %141 = sbr.rel (%p138) target = $region32
    $region31: #{conv2d_pallas.1} parent=5 // pred_region
      %s142 = ssub.s32 %s9, 1
      %p143 = scmp.lt.s32.totalorder %s14, 1
      %s144 = scalar_select %p143, %s14, 1
      %s145 = smul.addr %s144, 25
      %s146 = smul.addr %s145, 8
      %s147 = scalar_lea.vmem %s0, %s146
      %p148 = pneg %p35
      %p149 = pneg %p32
      %p150 = pneg %p56
      %p151 = pneg %p53
      %p152 = pneg %p77
      %p153 = pneg %p74
      %p154 = pneg %p103
      %p155 = pneg %p100
      %p156 = scmp.lt.s32.totalorder %s14, 1
      %s157 = scalar_select %p156, %s14, 1
      %s158 = smul.addr %s157, 25
      %s159 = smul.addr %s158, 8
      %s160 = scalar_lea.vmem %s3, %s159
      %p161 = scmp.lt.s32.totalorder %s14, 1
      %s162 = scalar_select %p161, %s14, 1
      %s163 = smul.addr %s162, 25
      %s164 = smul.addr %s163, 8
      %s165 = scalar_lea.vmem %s0, %s164
      %p166 = scmp.lt.s32.totalorder %s14, 1
      %s167 = scalar_select %p166, %s14, 1
      %s168 = smul.addr %s167, 25
      %s169 = smul.addr %s168, 8
      %s170 = scalar_lea.vmem %s3, %s169
      %v171 = vld [vmem:[%s165] sm:$0xff]
      %v172 = vld [vmem:[%s165 + $0x8] sm:$0xff]
      %v173 = vld [vmem:[%s165 + $0x10] sm:$0xff]
      %v174 = vld [vmem:[%s165 + $0x18] sm:$0xff]
      %v175 = vld [vmem:[%s165 + $0x20] sm:$0xff]
      %v176 = vld [vmem:[%s165 + $0x28] sm:$0xff]
      %v177 = vld [vmem:[%s165 + $0x30] sm:$0xff]
      %v178 = vld [vmem:[%s165 + $0x38] sm:$0xff]
      %v179 = vld [vmem:[%s165 + $0x40] sm:$0xff]
      %v180 = vld [vmem:[%s165 + $0x48] sm:$0xff]
      %v181 = vld [vmem:[%s165 + $0x50] sm:$0xff]
      %v182 = vld [vmem:[%s165 + $0x58] sm:$0xff]
      %v183 = vld [vmem:[%s165 + $0x60] sm:$0xff]
      %v184 = vld [vmem:[%s165 + $0x68] sm:$0xff]
      %v185 = vld [vmem:[%s165 + $0x70] sm:$0xff]
      %v186 = vld [vmem:[%s165 + $0x78] sm:$0xff]
      %v187 = vld [vmem:[%s165 + $0x80] sm:$0xff]
      %v188 = vld [vmem:[%s165 + $0x88] sm:$0xff]
      %v189 = vld [vmem:[%s165 + $0x90] sm:$0xff]
      %v190 = vld [vmem:[%s165 + $0x98] sm:$0xff]
      %v191 = vld [vmem:[%s165 + $0xa0] sm:$0xff]
      %v192 = vld [vmem:[%s165 + $0xa8] sm:$0xff]
      %v193 = vld [vmem:[%s165 + $0xb0] sm:$0xff]
      %v194 = vld [vmem:[%s165 + $0xb8] sm:$0xff]
      %v195 = vld [vmem:[%s165 + $0xc0] sm:$0xf]
      %v196 = vld [vmem:[%s1] sm:$0xff]
      %v197 = vld [vmem:[%s1 + $0x8] sm:$0xff]
      %v198 = vld [vmem:[%s1 + $0x10] sm:$0xff]
      %v199 = vld [vmem:[%s1 + $0x18] sm:$0x7]
      %v200 = vld [vmem:[%s2] sm:$0x1]
      %v202 = vlaneseq
      %v203 = vshrl.u32 %v202, 7
      %v204 = vsub.s32 0, %v203
      %v205 = vrot.slane %v200, %v204
      %vm207 = vcmask 220160
      %v209 = vsel %vm207, %v171, 0
      %v212 = vsel %vm207, %v172, 0
      %v215 = vsel %vm207, %v173, 0
      %v218 = vsel %vm207, %v174, 0
      %v221 = vsel %vm207, %v175, 0
      %v224 = vsel %vm207, %v176, 0
      %v227 = vsel %vm207, %v177, 0
      %v230 = vsel %vm207, %v178, 0
      %v233 = vsel %vm207, %v179, 0
      %v236 = vsel %vm207, %v180, 0
      %v239 = vsel %vm207, %v181, 0
      %v242 = vsel %vm207, %v182, 0
      %v245 = vsel %vm207, %v183, 0
      %v248 = vsel %vm207, %v184, 0
      %v251 = vsel %vm207, %v185, 0
      %v254 = vsel %vm207, %v186, 0
      %v257 = vsel %vm207, %v187, 0
      %v260 = vsel %vm207, %v188, 0
      %v263 = vsel %vm207, %v189, 0
      %v266 = vsel %vm207, %v190, 0
      %v269 = vsel %vm207, %v191, 0
      %v272 = vsel %vm207, %v192, 0
      %v275 = vsel %vm207, %v193, 0
      %v278 = vsel %vm207, %v194, 0
      %v281 = vsel %vm207, %v195, 0
      %vm283 = vcmask 1042432
      %v285 = vsel %vm283, %v199, 0
      %287 = vmatprep.subr.mxu0 0.0
      %288 = vmatpush1.msra.mxu0 %v196
      %289 = vmatprep.subr.mxu0 0.0
      %290 = vmatpush1.msra.mxu0 %v197
      %291 = vmatprep.subr.mxu0 0.0
      %292 = vmatpush1.msra.mxu0 %v198
      %293 = vmatprep.subr.mxu0 0.0
      %294 = vmatpush1.msra.mxu0 %v285
      %295 = vmatprep.subr.mxu0 0.0
      %296 = vmatpush1.msra.mxu0 0.0
      %297 = vmatprep.subr.mxu0 0.0
      %298 = vmatpush1.msra.mxu0 0.0
      %299 = vmatprep.subr.mxu0 0.0
      %300 = vmatpush1.msra.mxu0 0.0
      %301 = vmatprep.subr.mxu0 0.0
      %302 = vmatpush1.msra.mxu0 0.0
      %303 = vmatprep.subr.mxu0 0.0
      %304 = vmatpush1.msra.mxu0 0.0
      %305 = vmatprep.subr.mxu0 0.0
      %306 = vmatpush1.msra.mxu0 0.0
      %307 = vmatprep.subr.mxu0 0.0
      %308 = vmatpush1.msra.mxu0 0.0
      %309 = vmatprep.subr.mxu0 0.0
      %310 = vmatpush1.msra.mxu0 0.0
      %311 = vmatprep.subr.mxu0 0.0
      %312 = vmatpush1.msra.mxu0 0.0
      %313 = vmatprep.subr.mxu0 0.0
      %314 = vmatpush1.msra.mxu0 0.0
      %315 = vmatprep.subr.mxu0 0.0
      %316 = vmatpush1.msra.mxu0 0.0
      %317 = vmatprep.subr.mxu0 0.0
      %318 = vmatpush1.msra.mxu0 0.0
      %319 = vmatprep.subr.mxu0 0.0
      %320 = vmatpush1.msra.mxu0 0.0
      %321 = vmatprep.subr.mxu0 0.0
      %322 = vmatpush1.msra.mxu0 0.0
      %323 = vmatprep.subr.mxu0 0.0
      %324 = vmatpush1.msra.mxu0 0.0
      %325 = vmatprep.subr.mxu0 0.0
      %326 = vmatpush1.msra.mxu0 0.0
      %327 = vmatprep.subr.mxu0 0.0
      %328 = vmatpush1.msra.mxu0 0.0
      %329 = vmatprep.subr.mxu0 0.0
      %330 = vmatpush1.msra.mxu0 0.0
      %331 = vmatprep.subr.mxu0 0.0
      %332 = vmatpush1.msra.mxu0 0.0
      %333 = vmatprep.subr.mxu0 0.0
      %334 = vmatpush1.msra.mxu0 0.0
      %335 = vmatprep.subr.mxu0 0.0
      %336 = vmatpush1.msra.mxu0 0.0
      %337 = vmatprep.subr.mxu0 0.0
      %338 = vmatpush1.msra.mxu0 0.0
      %339 = vmatprep.subr.mxu0 0.0
      %340 = vmatpush1.msra.mxu0 0.0
      %341 = vmatprep.subr.mxu0 0.0
      %342 = vmatpush1.msra.mxu0 0.0
      %343 = vmatprep.subr.mxu0 0.0
      %344 = vmatpush1.msra.mxu0 0.0
      %345 = vmatprep.subr.mxu0 0.0
      %346 = vmatpush1.msra.mxu0 0.0
      %347 = vmatprep.subr.mxu0 0.0
      %348 = vmatpush1.msra.mxu0 0.0
      %349 = vmatprep.subr.mxu0 0.0
      %350 = vmatpush1.msra.mxu0 0.0
      %351 = vmatprep.mubr.f32.mxu0 0.0
      %352 = vmatmul.mubr.f32.gmra.mrb[0].mxu0 %v209
      %v353 = vpop.f32.mrb[0].mxu0
      %v354 = vadd.f32 %v205, %v353
      %v355 = vpop.f32.mrb[0].mxu0
      %356 = vmatprep.mubr.f32.mxu0 0.0
      %357 = vmatmul.mubr.f32.gmra.mrb[0].mxu0 %v212
      %v358 = vpop.f32.mrb[0].mxu0
      %v359 = vadd.f32 %v205, %v358
      %v360 = vpop.f32.mrb[0].mxu0
      %361 = vmatprep.mubr.f32.mxu0 0.0
      %362 = vmatmul.mubr.f32.gmra.mrb[0].mxu0 %v215
      %v363 = vpop.f32.mrb[0].mxu0
      %v364 = vadd.f32 %v205, %v363
      %v365 = vpop.f32.mrb[0].mxu0
      %366 = vmatprep.mubr.f32.mxu0 0.0
      %367 = vmatmul.mubr.f32.gmra.mrb[0].mxu0 %v218
      %v368 = vpop.f32.mrb[0].mxu0
      %v369 = vadd.f32 %v205, %v368
      %v370 = vpop.f32.mrb[0].mxu0
      %371 = vmatprep.mubr.f32.mxu0 0.0
      %372 = vmatmul.mubr.f32.gmra.mrb[0].mxu0 %v221
      %v373 = vpop.f32.mrb[0].mxu0
      %v374 = vadd.f32 %v205, %v373
      %v375 = vpop.f32.mrb[0].mxu0
      %376 = vmatprep.mubr.f32.mxu0 0.0
      %377 = vmatmul.mubr.f32.gmra.mrb[0].mxu0 %v224
      %v378 = vpop.f32.mrb[0].mxu0
      %v379 = vadd.f32 %v205, %v378
      %v380 = vpop.f32.mrb[0].mxu0
      %381 = vmatprep.mubr.f32.mxu0 0.0
      %382 = vmatmul.mubr.f32.gmra.mrb[0].mxu0 %v227
      %v383 = vpop.f32.mrb[0].mxu0
      %v384 = vadd.f32 %v205, %v383
      %v385 = vpop.f32.mrb[0].mxu0
      %386 = vmatprep.mubr.f32.mxu0 0.0
      %387 = vmatmul.mubr.f32.gmra.mrb[0].mxu0 %v230
      %v388 = vpop.f32.mrb[0].mxu0
      %v389 = vadd.f32 %v205, %v388
      %v390 = vpop.f32.mrb[0].mxu0
      %391 = vmatprep.mubr.f32.mxu0 0.0
      %392 = vmatmul.mubr.f32.gmra.mrb[0].mxu0 %v233
      %v393 = vpop.f32.mrb[0].mxu0
      %v394 = vadd.f32 %v205, %v393
      %v395 = vpop.f32.mrb[0].mxu0
      %396 = vmatprep.mubr.f32.mxu0 0.0
      %397 = vmatmul.mubr.f32.gmra.mrb[0].mxu0 %v236
      %v398 = vpop.f32.mrb[0].mxu0
      %v399 = vadd.f32 %v205, %v398
      %v400 = vpop.f32.mrb[0].mxu0
      %401 = vmatprep.mubr.f32.mxu0 0.0
      %402 = vmatmul.mubr.f32.gmra.mrb[0].mxu0 %v239
      %v403 = vpop.f32.mrb[0].mxu0
      %v404 = vadd.f32 %v205, %v403
      %v405 = vpop.f32.mrb[0].mxu0
      %406 = vmatprep.mubr.f32.mxu0 0.0
      %407 = vmatmul.mubr.f32.gmra.mrb[0].mxu0 %v242
      %v408 = vpop.f32.mrb[0].mxu0
      %v409 = vadd.f32 %v205, %v408
      %v410 = vpop.f32.mrb[0].mxu0
      %411 = vmatprep.mubr.f32.mxu0 0.0
      %412 = vmatmul.mubr.f32.gmra.mrb[0].mxu0 %v245
      %v413 = vpop.f32.mrb[0].mxu0
      %v414 = vadd.f32 %v205, %v413
      %v415 = vpop.f32.mrb[0].mxu0
      %416 = vmatprep.mubr.f32.mxu0 0.0
      %417 = vmatmul.mubr.f32.gmra.mrb[0].mxu0 %v248
      %v418 = vpop.f32.mrb[0].mxu0
      %v419 = vadd.f32 %v205, %v418
      %v420 = vpop.f32.mrb[0].mxu0
      %421 = vmatprep.mubr.f32.mxu0 0.0
      %422 = vmatmul.mubr.f32.gmra.mrb[0].mxu0 %v251
      %v423 = vpop.f32.mrb[0].mxu0
      %v424 = vadd.f32 %v205, %v423
      %v425 = vpop.f32.mrb[0].mxu0
      %426 = vmatprep.mubr.f32.mxu0 0.0
      %427 = vmatmul.mubr.f32.gmra.mrb[0].mxu0 %v254
      %v428 = vpop.f32.mrb[0].mxu0
      %v429 = vadd.f32 %v205, %v428
      %v430 = vpop.f32.mrb[0].mxu0
      %431 = vmatprep.mubr.f32.mxu0 0.0
      %432 = vmatmul.mubr.f32.gmra.mrb[0].mxu0 %v257
      %v433 = vpop.f32.mrb[0].mxu0
      %v434 = vadd.f32 %v205, %v433
      %v435 = vpop.f32.mrb[0].mxu0
      %436 = vmatprep.mubr.f32.mxu0 0.0
      %437 = vmatmul.mubr.f32.gmra.mrb[0].mxu0 %v260
      %v438 = vpop.f32.mrb[0].mxu0
      %v439 = vadd.f32 %v205, %v438
      %v440 = vpop.f32.mrb[0].mxu0
      %441 = vmatprep.mubr.f32.mxu0 0.0
      %442 = vmatmul.mubr.f32.gmra.mrb[0].mxu0 %v263
      %v443 = vpop.f32.mrb[0].mxu0
      %v444 = vadd.f32 %v205, %v443
      %v445 = vpop.f32.mrb[0].mxu0
      %446 = vmatprep.mubr.f32.mxu0 0.0
      %447 = vmatmul.mubr.f32.gmra.mrb[0].mxu0 %v266
      %v448 = vpop.f32.mrb[0].mxu0
      %v449 = vadd.f32 %v205, %v448
      %v450 = vpop.f32.mrb[0].mxu0
      %451 = vmatprep.mubr.f32.mxu0 0.0
      %452 = vmatmul.mubr.f32.gmra.mrb[0].mxu0 %v269
      %v453 = vpop.f32.mrb[0].mxu0
      %v454 = vadd.f32 %v205, %v453
      %v455 = vpop.f32.mrb[0].mxu0
      %456 = vmatprep.mubr.f32.mxu0 0.0
      %457 = vmatmul.mubr.f32.gmra.mrb[0].mxu0 %v272
      %v458 = vpop.f32.mrb[0].mxu0
      %v459 = vadd.f32 %v205, %v458
      %v460 = vpop.f32.mrb[0].mxu0
      %461 = vmatprep.mubr.f32.mxu0 0.0
      %462 = vmatmul.mubr.f32.gmra.mrb[0].mxu0 %v275
      %v463 = vpop.f32.mrb[0].mxu0
      %v464 = vadd.f32 %v205, %v463
      %v465 = vpop.f32.mrb[0].mxu0
      %466 = vmatprep.mubr.f32.mxu0 0.0
      %467 = vmatmul.mubr.f32.gmra.mrb[0].mxu0 %v278
      %v468 = vpop.f32.mrb[0].mxu0
      %v469 = vadd.f32 %v205, %v468
      %v470 = vpop.f32.mrb[0].mxu0
      %471 = vmatprep.mubr.f32.mxu0 0.0
      %472 = vmatmul.mubr.f32.gmra.mrb[0].mxu0 %v281
      %v473 = vpop.f32.mrb[0].mxu0
      %v474 = vadd.f32 %v205, %v473
      %v475 = vpop.f32.mrb[0].mxu0
      %476 = vdwg.mxu0
      %vm477 = vcmask 523264
      %478 = vst.msk [vmem:[%s170] sm:$0xff] %vm477, %v354
      %479 = vst.msk [vmem:[%s170 + $0x8] sm:$0xff] %vm477, %v359
      %480 = vst.msk [vmem:[%s170 + $0x10] sm:$0xff] %vm477, %v364
      %481 = vst.msk [vmem:[%s170 + $0x18] sm:$0xff] %vm477, %v369
      %482 = vst.msk [vmem:[%s170 + $0x20] sm:$0xff] %vm477, %v374
      %483 = vst.msk [vmem:[%s170 + $0x28] sm:$0xff] %vm477, %v379
      %484 = vst.msk [vmem:[%s170 + $0x30] sm:$0xff] %vm477, %v384
      %485 = vst.msk [vmem:[%s170 + $0x38] sm:$0xff] %vm477, %v389
      %486 = vst.msk [vmem:[%s170 + $0x40] sm:$0xff] %vm477, %v394
      %487 = vst.msk [vmem:[%s170 + $0x48] sm:$0xff] %vm477, %v399
      %488 = vst.msk [vmem:[%s170 + $0x50] sm:$0xff] %vm477, %v404
      %489 = vst.msk [vmem:[%s170 + $0x58] sm:$0xff] %vm477, %v409
      %490 = vst.msk [vmem:[%s170 + $0x60] sm:$0xff] %vm477, %v414
      %491 = vst.msk [vmem:[%s170 + $0x68] sm:$0xff] %vm477, %v419
      %492 = vst.msk [vmem:[%s170 + $0x70] sm:$0xff] %vm477, %v424
      %493 = vst.msk [vmem:[%s170 + $0x78] sm:$0xff] %vm477, %v429
      %494 = vst.msk [vmem:[%s170 + $0x80] sm:$0xff] %vm477, %v434
      %495 = vst.msk [vmem:[%s170 + $0x88] sm:$0xff] %vm477, %v439
      %496 = vst.msk [vmem:[%s170 + $0x90] sm:$0xff] %vm477, %v444
      %497 = vst.msk [vmem:[%s170 + $0x98] sm:$0xff] %vm477, %v449
      %498 = vst.msk [vmem:[%s170 + $0xa0] sm:$0xff] %vm477, %v454
      %499 = vst.msk [vmem:[%s170 + $0xa8] sm:$0xff] %vm477, %v459
      %500 = vst.msk [vmem:[%s170 + $0xb0] sm:$0xff] %vm477, %v464
      %501 = vst.msk [vmem:[%s170 + $0xb8] sm:$0xff] %vm477, %v469
      %vm502 = vcmask 519168
      %503 = vst.msk [vmem:[%s170 + $0xc0] sm:$0xf] %vm502, %v474
      %p504 = scmp.lt.s32.totalorder %s14, 1
      %s505 = scalar_select %p504, %s14, 1
      %s506 = smul.addr %s505, 25
      %s507 = smul.addr %s506, 8
      %s508 = scalar_lea.vmem %s3, %s507
      // Predicated region
      $region33: #{conv2d_pallas.1} parent=31 // pred_check
        %p509 = pneg %p100
      $region34: #{conv2d_pallas.1} parent=31 // pred_check_branch
        %511 = sbr.rel (%p509) target = $region36
      $region35: #{conv2d_pallas.1} parent=31 // pred_region
        _
      $region36: #{conv2d_pallas.1} parent=31 // pred_fallthru
        _
    $region32: #{conv2d_pallas.1} parent=5 // pred_fallthru
      _
    %p512 = scmp.le.s32.totalorder 2, %s9
    // Predicated region
    $region37: #{conv2d_pallas.1} parent=5 // pred_check
      %p513 = pneg %p512
    $region38: #{conv2d_pallas.1} parent=5 // pred_check_branch
      %515 = sbr.rel (%p513) target = $region40
    $region39: #{conv2d_pallas.1} parent=5 // pred_region
      %s516 = ssub.s32 %s9, 2
      // Predicated region
      $region41: #{conv2d_pallas.1} parent=39 // pred_check
        %p517 = pneg %p106
      $region42: #{conv2d_pallas.1} parent=39 // pred_check_branch
        %519 = sbr.rel (%p517) target = $region44
      $region43: #{conv2d_pallas.1} parent=39 // pred_region
        %p520 = scmp.lt.s32.totalorder %s15, 1
        %s521 = scalar_select %p520, %s15, 1
        %s522 = smul.addr %s521, 25
        %s523 = smul.addr %s522, 8
        %s524 = scalar_lea.vmem %s3, %s523
      $region44: #{conv2d_pallas.1} parent=39 // pred_fallthru
        _
    $region40: #{conv2d_pallas.1} parent=5 // pred_fallthru
      _
  $region6: #{conv2d_pallas.1} parent=0 // loop_footer
    %s13 = sadd.s32 1, %s9
  $region7: #{conv2d_pallas.1} parent=0 // loop_footer_branch
    %8 = sbr.rel target = $region3
  $region8: #{conv2d_pallas.1} parent=0 // loop_exit
    _

</llo_original>
